<compile_context>
chip_gen: v5e
topology: v5e:2x2
jax: 0.10.0
libtpu: 0.0.40
codegen_flags: <defaults>
</compile_context>

<pallas_src>
import functools

import jax
import jax.numpy as jnp
from jax import lax
from jax.experimental import pallas as pl
from jax.experimental.pallas import tpu as pltpu


def _newton_recip(x):
    """EUP approximate reciprocal refined with one Newton step (~f32 accurate)."""
    r = pl.reciprocal(x, approx=True)
    return r * (2.0 - x * r)


def _cluster_assign_kernel(x_ref, c_ref, csq_ref, o_ref, *, alpha):
    x = x_ref[...].astype(jnp.float32)          # (tm, D)
    c = c_ref[...].astype(jnp.float32)          # (K, D), VMEM-resident

    # Squared distances: ||x||^2 + ||c||^2 - 2 x.c ; cross term on the MXU.
    x_sq = jnp.sum(x * x, axis=-1, keepdims=True)                    # (tm, 1)
    cross = jnp.einsum("nd,kd->nk", x, c,
                       preferred_element_type=jnp.float32)           # (tm, K)
    norm_sq = jnp.maximum(x_sq + csq_ref[...] - 2.0 * cross, 0.0)    # (tm, K)

    base = 1.0 + norm_sq * (1.0 / alpha)        # (tm, K)
    two_power = alpha + 1.0                     # == 2 * power

    if alpha == 1.0:
        # power == 1: q = 1 / base  -> single reciprocal, no exp/log pair.
        numerator = _newton_recip(base)
    elif abs(two_power - round(two_power)) < 1e-12 and 1 <= round(two_power) <= 8:
        # power = n/2 with small integer n: q = rsqrt(base)^n (EUP rsqrt +
        # integer-pow mults; avoids the exp/log transcendental pair).
        numerator = lax.integer_pow(lax.rsqrt(base), int(round(two_power)))
    else:
        power = (alpha + 1.0) / 2.0
        numerator = jnp.exp(-power * jnp.log(base))

    denom = jnp.sum(numerator, axis=-1, keepdims=True)               # (tm, 1)
    o_ref[...] = (numerator * _newton_recip(denom)).astype(o_ref.dtype)


def _pick_tm(N, D, K, vmem_budget_bytes=8 << 20):
    """Largest sublane-aligned row tile within the VMEM budget.

    Budget covers the double-buffered input tile and output tile (f32); the
    resident centers / ||c||^2 blocks are tiny.  8 MiB stays well inside the
    default scoped-VMEM limit on v5e/v6e and v7x's smaller physical VMEM.
    """
    bytes_per_row = 2 * (D + K) * 4
    cap = max(8, min(2048, (vmem_budget_bytes // bytes_per_row) // 8 * 8))
    n8 = ((N + 7) // 8) * 8
    if n8 <= cap:
        # Whole problem fits one tile; split in two when possible so the
        # "parallel" grid axis can shard across 2 TensorCores (v7x).
        if n8 >= 16:
            return ((n8 // 2 + 7) // 8) * 8
        return n8
    return cap


def cluster_assignment(inputs, cluster_centers, alpha, *, tm=None):
    """inputs: (N, D), cluster_centers: (K, D) -> (N, K) soft assignments."""
    N, D = inputs.shape
    K, D2 = cluster_centers.shape
    assert D == D2

    if tm is None:
        tm = _pick_tm(N, D, K)

    # ||c||^2 computed once outside the grid loop, shaped (1, K) for lane layout.
    centers_f32 = cluster_centers.astype(jnp.float32)
    c_sq = jnp.sum(centers_f32 * centers_f32, axis=-1)[None, :]      # (1, K)

    kernel = functools.partial(_cluster_assign_kernel, alpha=float(alpha))

    return pl.pallas_call(
        kernel,
        out_shape=jax.ShapeDtypeStruct((N, K), jnp.float32),
        grid_spec=pltpu.PrefetchScalarGridSpec(
            num_scalar_prefetch=0,
            grid=(pl.cdiv(N, tm),),
            in_specs=[
                pl.BlockSpec((tm, D), lambda i: (i, 0)),   # row tile of inputs
                pl.BlockSpec((K, D), lambda i: (0, 0)),    # centers, resident
                pl.BlockSpec((1, K), lambda i: (0, 0)),    # ||c||^2, resident
            ],
            out_specs=pl.BlockSpec((tm, K), lambda i: (i, 0)),
        ),
        compiler_params=pltpu.CompilerParams(
            dimension_semantics=("parallel",)),
    )(inputs, cluster_centers, c_sq)


def xavier_uniform(key, shape, dtype=jnp.float32):
    # matches nn.init.xavier_uniform_ for a 2-D tensor (fan_out, fan_in) = shape
    fan_out, fan_in = shape
    bound = (6.0 / (fan_in + fan_out)) ** 0.5
    return jax.random.uniform(key, shape, dtype, minval=-bound, maxval=bound)


def _reference(inputs, centers, alpha):
    # pure-JAX reference with exact PyTorch semantics
    norm_sq = jnp.sum((inputs[:, None, :] - centers[None, :, :]) ** 2, axis=2)
    num = (1.0 / (1.0 + norm_sq / alpha)) ** ((alpha + 1.0) / 2.0)
    return num / jnp.sum(num, axis=1, keepdims=True)


if __name__ == "__main__":
    cluster_number = 4
    embedding_dimension = 32

    key = jax.random.PRNGKey(0)
    k_x, k_c, k_x2 = jax.random.split(key, 3)

    cluster_centers = xavier_uniform(k_c, (cluster_number, embedding_dimension))

    # Case 1: module-sized problem (seq=8, hidden=32), alpha=1.0 (recip path).
    inputs = jax.random.normal(k_x, (8, embedding_dimension), dtype=jnp.float32)
    out = jax.block_until_ready(cluster_assignment(inputs, cluster_centers, 1.0))
    ref = _reference(inputs, cluster_centers, 1.0)
    assert out.shape == (8, cluster_number)
    assert jnp.allclose(out, ref, atol=1e-5, rtol=1e-5), (out, ref)
    assert jnp.allclose(jnp.sum(out, axis=1), 1.0, atol=1e-5)

    # Case 2: N not a multiple of the row tile (partial last block, no padding
    # copies) and integer alpha=2.0 (rsqrt^3 path, no exp/log pair).
    inputs2 = jax.random.normal(k_x2, (20, embedding_dimension), dtype=jnp.float32)
    out2 = jax.block_until_ready(cluster_assignment(inputs2, cluster_centers, 2.0))
    ref2 = _reference(inputs2, cluster_centers, 2.0)
    assert out2.shape == (20, cluster_number)
    assert jnp.allclose(out2, ref2, atol=1e-5, rtol=1e-5), (out2, ref2)
    assert jnp.allclose(jnp.sum(out2, axis=1), 1.0, atol=1e-5)

    # Case 3: non-half-integer power (alpha=1.5) exercises the exp/log path.
    out3 = jax.block_until_ready(cluster_assignment(inputs2, cluster_centers, 1.5))
    ref3 = _reference(inputs2, cluster_centers, 1.5)
    assert jnp.allclose(out3, ref3, atol=1e-5, rtol=1e-5), (out3, ref3)
    assert jnp.allclose(jnp.sum(out3, axis=1), 1.0, atol=1e-5)

    print("KERNEL_OK")
</pallas_src>

<mosaic_0001>
module attributes {stable_mosaic.version = 11 : i64} {
  func.func @_cluster_assign_kernel(%arg0: i32, %arg1: memref<8x32xf32, #tpu.memory_space<vmem>>, %arg2: memref<4x32xf32, #tpu.memory_space<vmem>>, %arg3: memref<1x4xf32, #tpu.memory_space<vmem>>, %arg4: memref<8x4xf32, #tpu.memory_space<vmem>>) attributes {dimension_semantics = [#tpu.dimension_semantics<parallel>], iteration_bounds = array<i64: 1>, scalar_prefetch = 0 : i64, scratch_operands = 0 : i64, tpu.core_type = #tpu.core_type<tc>, window_params = [{transform_indices = @transform_0, window_bounds = array<i64: 8, 32>}, {pipeline_mode = #tpu.pipeline_mode<synchronous>, transform_indices = @transform_1, window_bounds = array<i64: 4, 32>}, {pipeline_mode = #tpu.pipeline_mode<synchronous>, transform_indices = @transform_2, window_bounds = array<i64: 1, 4>}, {transform_indices = @transform_3, window_bounds = array<i64: 8, 4>}]} {
    %c0 = arith.constant 0 : index
    %c0_0 = arith.constant 0 : index
    %0 = vector.load %arg1[%c0, %c0_0] : memref<8x32xf32, #tpu.memory_space<vmem>>, vector<8x32xf32>
    %c0_1 = arith.constant 0 : index
    %c0_2 = arith.constant 0 : index
    %1 = vector.load %arg2[%c0_1, %c0_2] : memref<4x32xf32, #tpu.memory_space<vmem>>, vector<4x32xf32>
    %2 = arith.mulf %0, %0 : vector<8x32xf32>
    %cst = arith.constant dense<0.000000e+00> : vector<8xf32>
    %3 = vector.multi_reduction <add>, %2, %cst [1] : vector<8x32xf32> to vector<8xf32>
    %4 = vector.shape_cast %3 : vector<8xf32> to vector<8x1xf32>
    "tpu.trace_start"() <{level = 10 : i32, message = "nd,kd->nk"}> : () -> ()
    %cst_3 = arith.constant dense<0.000000e+00> : vector<8x4xf32>
    %5 = tpu.matmul %0, %1, %cst_3 {dimension_numbers = #tpu.dot_dimension_numbers<[1], [1], [0], [0], [0, 0, 1, 0], [], []>} : vector<8x32xf32>, vector<4x32xf32>, vector<8x4xf32> -> vector<8x4xf32>
    "tpu.trace_stop"() : () -> ()
    %c0_4 = arith.constant 0 : index
    %c0_5 = arith.constant 0 : index
    %6 = vector.load %arg3[%c0_4, %c0_5] : memref<1x4xf32, #tpu.memory_space<vmem>>, vector<1x4xf32>
    %7 = vector.broadcast %4 : vector<8x1xf32> to vector<8x4xf32>
    %8 = vector.broadcast %6 : vector<1x4xf32> to vector<8x4xf32>
    %9 = arith.addf %7, %8 : vector<8x4xf32>
    %cst_6 = arith.constant 2.000000e+00 : f32
    %10 = vector.broadcast %cst_6 : f32 to vector<8x4xf32>
    %11 = arith.mulf %10, %5 : vector<8x4xf32>
    %12 = arith.subf %9, %11 : vector<8x4xf32>
    %cst_7 = arith.constant 0.000000e+00 : f32
    %13 = vector.broadcast %cst_7 : f32 to vector<8x4xf32>
    %14 = arith.maximumf %12, %13 : vector<8x4xf32>
    %cst_8 = arith.constant 1.000000e+00 : f32
    %15 = vector.broadcast %cst_8 : f32 to vector<8x4xf32>
    %16 = arith.mulf %14, %15 : vector<8x4xf32>
    %cst_9 = arith.constant 1.000000e+00 : f32
    %17 = vector.broadcast %cst_9 : f32 to vector<8x4xf32>
    %18 = arith.addf %17, %16 : vector<8x4xf32>
    %19 = tpu.reciprocal %18 {approx = true} : vector<8x4xf32> -> vector<8x4xf32>
    %20 = arith.mulf %18, %19 : vector<8x4xf32>
    %cst_10 = arith.constant 2.000000e+00 : f32
    %21 = vector.broadcast %cst_10 : f32 to vector<8x4xf32>
    %22 = arith.subf %21, %20 : vector<8x4xf32>
    %23 = arith.mulf %19, %22 : vector<8x4xf32>
    %cst_11 = arith.constant dense<0.000000e+00> : vector<8xf32>
    %24 = vector.multi_reduction <add>, %23, %cst_11 [1] : vector<8x4xf32> to vector<8xf32>
    %25 = vector.shape_cast %24 : vector<8xf32> to vector<8x1xf32>
    %26 = tpu.reciprocal %25 {approx = true} : vector<8x1xf32> -> vector<8x1xf32>
    %27 = arith.mulf %25, %26 : vector<8x1xf32>
    %cst_12 = arith.constant 2.000000e+00 : f32
    %28 = vector.broadcast %cst_12 : f32 to vector<8x1xf32>
    %29 = arith.subf %28, %27 : vector<8x1xf32>
    %30 = arith.mulf %26, %29 : vector<8x1xf32>
    %31 = vector.broadcast %30 : vector<8x1xf32> to vector<8x4xf32>
    %32 = arith.mulf %23, %31 : vector<8x4xf32>
    %c0_13 = arith.constant 0 : index
    %c0_14 = arith.constant 0 : index
    %33 = vector.load %arg4[%c0_13, %c0_14] : memref<8x4xf32, #tpu.memory_space<vmem>>, vector<8x4xf32>
    tpu.vector_store %arg4[%c0_13, %c0_14], %32 {strides = array<i32>} : memref<8x4xf32, #tpu.memory_space<vmem>>, vector<8x4xf32>,
    return
  }
  func.func @transform_0(%arg0: i32) -> (i32, i32) {
    %c0_i32 = arith.constant 0 : i32
    %c0_i32_0 = arith.constant 0 : i32
    return %arg0, %c0_i32 : i32, i32
  }
  func.func @transform_1(%arg0: i32) -> (i32, i32) {
    %c0_i32 = arith.constant 0 : i32
    %c0_i32_0 = arith.constant 0 : i32
    %c0_i32_1 = arith.constant 0 : i32
    return %c0_i32, %c0_i32_0 : i32, i32
  }
  func.func @transform_2(%arg0: i32) -> (i32, i32) {
    %c0_i32 = arith.constant 0 : i32
    %c0_i32_0 = arith.constant 0 : i32
    %c0_i32_1 = arith.constant 0 : i32
    return %c0_i32, %c0_i32_0 : i32, i32
  }
  func.func @transform_3(%arg0: i32) -> (i32, i32) {
    %c0_i32 = arith.constant 0 : i32
    %c0_i32_0 = arith.constant 0 : i32
    return %arg0, %c0_i32 : i32, i32
  }
}

</mosaic_0001>

<llo_original>
// kernel: tpu_custom_call.1
$region0: #{tpu_custom_call.1}
  #allocation0 [shape = 'u32[]', space=smem, size = 0x4, offset = 0x4, fixed_abs, tag = 'smem constant byte address 0x4 - core index']
  #allocation1 [shape = 'u32[72,128]{1,0:T(1,128)}', space=vmem, size = 0x9000, scoped, tag = 'internal scratch']
  %s0 = inlined_call_operand.hbm [shape: f32[8,32], index: 0, kind: input, shape index: {}]
  %s1 = inlined_call_operand.hbm [shape: f32[4,32], index: 1, kind: input, shape index: {}]
  %s2 = inlined_call_operand.vmem [shape: f32[1,4], index: 2, kind: input, shape index: {}]
  %s3 = inlined_call_operand.vmem [shape: f32[8,4], index: 3, kind: output, shape index: {}]
  %s4 = sld [smem:[#allocation0]]
  $region30: #{tpu_custom_call.1} parent=0
    _
  %s6 = ssub.s32 1, %s4
  %s7 = scalar_select 0, %s6, %s4
  $region1: #{tpu_custom_call.1} parent=0
    #allocation2 [shape = 'u8[4096]{0}', space=vmem, size = 0x1000, scoped, tag = 'input window, operand 0, single buffered']
    #allocation3 [shape = 's32[1]{0}', space=sflag, size = 0x4, scoped, tag = 'scoped memory for tpu_custom_call.1']
    #allocation4 [shape = 'u8[2048]{0}', space=vmem, size = 0x800, scoped, tag = 'input window, operand 1, single buffered']
    #allocation5 [shape = 's32[1]{0}', space=sflag, size = 0x4, scoped, tag = 'scoped memory for tpu_custom_call.1']
    %8 = vsyncpa [#allocation3], 0
    %9 = vsyncpa [#allocation5], 0
    // Predicated region
    $region2: #{tpu_custom_call.1} parent=1 // pred_check
      _
    $region3: #{tpu_custom_call.1} parent=1 // pred_check_branch
      %11 = sbr.rel (0) target = $region5
    $region4: #{tpu_custom_call.1} parent=1 // pred_region
      %13 = vsyncadd [#allocation3], 0
      %s15 = sshll.u32 %s0, 4
      %s16 = int_to_ptr.hbm [resolvable:$true] %s15
      %s17 = sshll.u32 [#allocation2], 4
      %s18 = int_to_ptr.vmem [resolvable:$true] %s17
      %20 = dma.hbm_to_vmem [thread:$0]  %s16, 128, %s18, [#allocation3]
    $region5: #{tpu_custom_call.1} parent=1 // pred_fallthru
      _
    // Predicated region
    $region6: #{tpu_custom_call.1} parent=1 // pred_check
      _
    $region7: #{tpu_custom_call.1} parent=1 // pred_check_branch
      %22 = sbr.rel (0) target = $region9
    $region8: #{tpu_custom_call.1} parent=1 // pred_region
      %24 = vsyncadd [#allocation5], 0
      %s26 = sshll.u32 %s1, 4
      %s27 = int_to_ptr.hbm [resolvable:$true] %s26
      %s28 = sshll.u32 [#allocation4], 4
      %s29 = int_to_ptr.vmem [resolvable:$true] %s28
      %31 = dma.hbm_to_vmem [thread:$0]  %s27, 64, %s29, [#allocation5]
    $region9: #{tpu_custom_call.1} parent=1 // pred_fallthru
      _
    // Predicated region
    $region10: #{tpu_custom_call.1} parent=1 // pred_check
      _
    $region11: #{tpu_custom_call.1} parent=1 // pred_check_branch
      %33 = sbr.rel (0) target = $region13
    $region12: #{tpu_custom_call.1} parent=1 // pred_region
      _
    $region13: #{tpu_custom_call.1} parent=1 // pred_fallthru
      _
    // Predicated region
    $region14: #{tpu_custom_call.1} parent=1 // pred_check
      _
    $region15: #{tpu_custom_call.1} parent=1 // pred_check_branch
      %35 = sbr.rel (0) target = $region17
    $region16: #{tpu_custom_call.1} parent=1 // pred_region
      %37 = dma.done [#allocation3], 128
    $region17: #{tpu_custom_call.1} parent=1 // pred_fallthru
      _
    // Predicated region
    $region18: #{tpu_custom_call.1} parent=1 // pred_check
      _
    $region19: #{tpu_custom_call.1} parent=1 // pred_check_branch
      %39 = sbr.rel (0) target = $region21
    $region20: #{tpu_custom_call.1} parent=1 // pred_region
      %41 = dma.done [#allocation5], 64
    $region21: #{tpu_custom_call.1} parent=1 // pred_fallthru
      _
    %v42 = vld [vmem:[#allocation2] sm:$0xff]
    %v43 = vld [vmem:[#allocation4] sm:$0xf]
    %v44 = vmul.f32 %v42, %v42
    %vm45 = vcmask 261120
    %v46 = vsel %vm45, %v44, 0.0
    %47 = vadd.xlane.f32.xlu0 %v46
    %v48 = vpop.xlane.xlu0 %47
    %v50 = vsel %vm45, %v42, 0
    %v53 = vsel %vm45, %v43, 0
    %55 = vmatpush.xpose.msra.mxu0 0.0
    %56 = vmatpush.xpose.msra.mxu0 0.0
    %57 = vmatpush.xpose.msra.mxu0 0.0
    %58 = vmatpush.xpose.msra.mxu0 0.0
    %59 = vmatpush.xpose.msra.mxu0 0.0
    %60 = vmatpush.xpose.msra.mxu0 0.0
    %61 = vmatpush.xpose.msra.mxu0 0.0
    %62 = vmatpush.xpose.msra.mxu0 0.0
    %63 = vmatpush.xpose.msra.mxu0 0.0
    %64 = vmatpush.xpose.msra.mxu0 0.0
    %65 = vmatpush.xpose.msra.mxu0 0.0
    %66 = vmatpush.xpose.msra.mxu0 0.0
    %67 = vmatpush.xpose.msra.mxu0 0.0
    %68 = vmatpush.xpose.msra.mxu0 0.0
    %69 = vmatpush.xpose.msra.mxu0 0.0
    %70 = vmatpush.xpose.msra.mxu0 %v53
    %71 = vmatmul.f32.gmra.mxu0 %v50
    %v72 = vpop.f32.mrf.mxu0
    %v73 = vadd.f32 0.0, %v72
    %74 = vdwg.mxu0
    %v75 = vld [vmem:[%s2] sm:$0x1]
    %v77 = vperm.slane %v75, 0
    %v79 = vadd.f32 %v48, %v77
    %v80 = vmul.f32 %v73, 2.0
    %v81 = vsub.f32 %v79, %v80
    %v82 = vmax.f32 %v81, 0.0
    %v83 = vadd.f32 %v82, 1.0
    %v84 = vrcp.pop %v83
    %v85 = vmul.f32 %v83, %v84
    %v86 = vsub.f32 2.0, %v85
    %v87 = vmul.f32 %v84, %v86
    %vm88 = vcmask 31744
    %v89 = vsel %vm88, %v87, 0.0
    %90 = vadd.xlane.f32.xlu0 %v89
    %v91 = vpop.xlane.xlu0 %90
    %v92 = vrcp.pop %v91
    %v93 = vmul.f32 %v91, %v92
    %v94 = vsub.f32 2.0, %v93
    %v95 = vmul.f32 %v92, %v94
    %v96 = vmul.f32 %v87, %v95
    %97 = vst.msk [vmem:[%s3] sm:$0xff] %vm88, %v96
    // Predicated region
    $region22: #{tpu_custom_call.1} parent=1 // pred_check
      _
    $region23: #{tpu_custom_call.1} parent=1 // pred_check_branch
      %99 = sbr.rel (0) target = $region25
    $region24: #{tpu_custom_call.1} parent=1 // pred_region
      _
    $region25: #{tpu_custom_call.1} parent=1 // pred_fallthru
      _
    // Predicated region
    $region26: #{tpu_custom_call.1} parent=1 // pred_check
      _
    $region27: #{tpu_custom_call.1} parent=1 // pred_check_branch
      %101 = sbr.rel (0) target = $region29
    $region28: #{tpu_custom_call.1} parent=1 // pred_region
      _
    $region29: #{tpu_custom_call.1} parent=1 // pred_fallthru
      _
    %102 = vsyncpa [#allocation3], 1
    %103 = vsyncpa [#allocation5], 1

</llo_original>
